<compile_context>
chip_gen: v6e
topology: v6e:2x2x1
jax: 0.10.0
libtpu: 0.0.40
codegen_flags: <defaults>
</compile_context>

<pallas_src>
import functools
import math

import jax
import jax.numpy as jnp
from jax.experimental import pallas as pl
from jax.experimental.pallas import tpu as pltpu


def _cdiv(a, b):
    return -(-a // b)


def _round_up(a, b):
    return _cdiv(a, b) * b


# Per-input-block byte budget and limits. Sized so double-buffered input blocks
# plus the in-kernel working copies stay well under the scoped-VMEM limit we
# request below (safe on v5e 16 MiB default raised to 32 MiB, v6e 32/128 MiB,
# v7x 32/64 MiB).
_BLOCK_BYTES = 4 * 1024 * 1024
_TL_MAX = 2048
_VMEM_LIMIT_BYTES = 32 * 1024 * 1024


def _kmax_kernel(x_ref, o_ref, acc_ref, *, k: int, L: int, TL: int, mask_l: bool):
    """Process one (TM, TL) chunk of the reduction axis for one row tile."""
    l_idx = pl.program_id(1)
    n_l = pl.num_programs(1)

    @pl.when(l_idx == 0)
    def _init():
        acc_ref[...] = jnp.full(acc_ref.shape, -jnp.inf, acc_ref.dtype)

    x = x_ref[...]
    if x.dtype != acc_ref.dtype:
        x = x.astype(acc_ref.dtype)
    tm, tl = x.shape
    neg = jnp.asarray(-jnp.inf, x.dtype)

    cols = jax.lax.broadcasted_iota(jnp.int32, (tm, tl), 1)
    if mask_l:
        # Last L-chunk may read past L (Pallas boundary blocks hold
        # unspecified values); knock those lanes out.
        x = jnp.where(cols + l_idx * TL < L, x, neg)

    # Top-k of this chunk: iterative max -> knock out first occurrence.
    # k is small and static, so this unrolls; the final knockout is skipped.
    chunk_vals = []
    for j in range(k):
        m = jnp.max(x, axis=-1, keepdims=True)                  # (TM, 1)
        chunk_vals.append(m)
        if j < k - 1:
            idx = jnp.argmax(x, axis=-1).astype(jnp.int32)[:, None]
            x = jnp.where(cols == idx, neg, x)

    # Merge with the running accumulator over a tiny (TM, 2k) array and write
    # each selected maximum straight into the accumulator column.
    merged = jnp.concatenate([acc_ref[...]] + chunk_vals, axis=1)
    mcols = jax.lax.broadcasted_iota(jnp.int32, merged.shape, 1)
    for j in range(k):
        m = jnp.max(merged, axis=-1, keepdims=True)
        acc_ref[:, j:j + 1] = m
        if j < k - 1:
            idx = jnp.argmax(merged, axis=-1).astype(jnp.int32)[:, None]
            merged = jnp.where(mcols == idx, neg, merged)

    @pl.when(l_idx == n_l - 1)
    def _finalize():
        o_ref[...] = acc_ref[...].astype(o_ref.dtype)


def kmax_pooling(x: jax.Array, k: int, dim: int) -> jax.Array:
    """Pallas equivalent of KMaxPoolingLayer(k, dim)(x)."""
    ndim = x.ndim
    dim = dim % ndim
    L = x.shape[dim]
    if k > L:
        raise ValueError(f"k={k} exceeds size {L} of dim {dim}")

    x_moved = jnp.moveaxis(x, dim, -1)
    lead_shape = x_moved.shape[:-1]
    R = math.prod(lead_shape) if lead_shape else 1

    pallas_dtype_ok = x.dtype in (jnp.dtype(jnp.float32), jnp.dtype(jnp.bfloat16))
    # Fast path: tiny reduction axis (<128 lanes -> poor lane utilization,
    # fixed pallas_call overhead dominates) or dtypes we don't want to round
    # through float (ints, fp16) -> let XLA's top_k handle it.
    if (not pallas_dtype_ok) or L < 128 or R == 0:
        vals = jax.lax.top_k(x_moved, k)[0]
        return jnp.moveaxis(vals, -1, dim)

    x2d = x_moved.reshape(R, L)
    compute_dtype = x.dtype                       # keep bf16 native on v6e/v7x
    elem_bytes = jnp.dtype(x.dtype).itemsize

    # --- VMEM-budget-driven tiling ---
    if L <= _TL_MAX:
        TL = L                                    # whole axis in one chunk
        mask_l = False
    else:
        TL = _TL_MAX                              # multiple of 128 -> chunked
        mask_l = (L % TL) != 0
    n_l = _cdiv(L, TL)

    TM = (_BLOCK_BYTES // (TL * elem_bytes)) // 8 * 8
    TM = max(8, TM)
    R8 = _round_up(R, 8)
    TM = min(TM, R8)
    if R8 >= 16:
        # Keep at least 2 row tiles so both v7x TensorCores / megacore see work.
        TM = min(TM, max(8, _round_up(_cdiv(R8, 2), 8)))
    n_rows = _cdiv(R, TM)

    out2d = pl.pallas_call(
        functools.partial(_kmax_kernel, k=k, L=L, TL=TL, mask_l=mask_l),
        out_shape=jax.ShapeDtypeStruct((R, k), x.dtype),
        grid_spec=pltpu.PrefetchScalarGridSpec(
            num_scalar_prefetch=0,
            grid=(n_rows, n_l),
            in_specs=[pl.BlockSpec((TM, TL), lambda i, l: (i, l))],
            out_specs=pl.BlockSpec((TM, k), lambda i, l: (i, 0)),
            scratch_shapes=[pltpu.VMEM((TM, k), compute_dtype)],
        ),
        compiler_params=pltpu.CompilerParams(
            dimension_semantics=("parallel", "arbitrary"),
            vmem_limit_bytes=_VMEM_LIMIT_BYTES,
        ),
    )(x2d)

    out = out2d.reshape(*lead_shape, k)
    return jnp.moveaxis(out, -1, dim)


class KMaxPoolingLayer:
    """Mirror of the PyTorch module (no parameters)."""

    def __init__(self, k: int, dim: int):
        self.k = k
        self.dim = dim

    def __call__(self, x: jax.Array) -> jax.Array:
        return kmax_pooling(x, self.k, self.dim)


if __name__ == "__main__":
    key = jax.random.PRNGKey(0)
    k1, k2, k3 = jax.random.split(key, 3)

    # 1) batch=2, channels=4, seq=256: Pallas path, single L chunk.
    x1 = jax.random.normal(k1, (2, 4, 256), dtype=jnp.float32)
    layer = KMaxPoolingLayer(3, 2)
    out1 = jax.block_until_ready(layer(x1))
    ref1 = jnp.moveaxis(jax.lax.top_k(jnp.moveaxis(x1, 2, -1), 3)[0], -1, 2)
    assert out1.shape == ref1.shape and out1.dtype == ref1.dtype
    assert jnp.allclose(out1, ref1), "mismatch (f32, single chunk)"

    # 2) ragged rows / length: R=15 (not /8), L=300 (not /128) -> boundary blocks.
    x2 = jax.random.normal(k2, (3, 5, 300), dtype=jnp.float32)
    out2 = jax.block_until_ready(kmax_pooling(x2, 4, -1))
    ref2 = jax.lax.top_k(x2, 4)[0]
    assert jnp.allclose(out2, ref2), "mismatch (ragged boundary blocks)"

    # 3) long sequence, bf16: chunked L axis with running top-k accumulator.
    x3 = jax.random.normal(k3, (2, 3, 2500), dtype=jnp.bfloat16)
    out3 = jax.block_until_ready(kmax_pooling(x3, 5, 2))
    ref3 = jax.lax.top_k(x3, 5)[0]
    assert out3.dtype == x3.dtype
    assert jnp.allclose(out3.astype(jnp.float32), ref3.astype(jnp.float32)), \
        "mismatch (bf16, chunked L)"

    # 4) tiny seq / int dtype -> fast path (original module demo shape).
    x4 = jax.random.randint(k1, (2, 4, 16), -100, 100, dtype=jnp.int32)
    out4 = jax.block_until_ready(kmax_pooling(x4, 3, 2))
    ref4 = jax.lax.top_k(x4, 3)[0]
    assert jnp.array_equal(out4, ref4), "mismatch (int fast path)"

    print("KERNEL_OK")
</pallas_src>

<mosaic_0001>
module attributes {stable_mosaic.version = 11 : i64} {
  func.func @_kmax_kernel(%arg0: i32, %arg1: i32, %arg2: memref<8x256xf32, #tpu.memory_space<vmem>>, %arg3: memref<8x3xf32, #tpu.memory_space<vmem>>, %arg4: memref<8x3xf32, #tpu.memory_space<vmem>>) attributes {dimension_semantics = [#tpu.dimension_semantics<parallel>, #tpu.dimension_semantics<arbitrary>], iteration_bounds = array<i64: 1, 1>, scalar_prefetch = 0 : i64, scratch_operands = 1 : i64, tpu.core_type = #tpu.core_type<tc>, window_params = [{transform_indices = @transform_0, window_bounds = array<i64: 8, 256>}, {transform_indices = @transform_1, window_bounds = array<i64: 8, 3>}]} {
    %c0_i32 = arith.constant 0 : i32
    %0 = arith.cmpi eq, %arg1, %c0_i32 : i32
    %1 = arith.extui %0 : i1 to i32
    %c0_i32_0 = arith.constant 0 : i32
    %2 = arith.cmpi ne, %1, %c0_i32_0 : i32
    scf.if %2 {
      %cst_19 = arith.constant 0xFF800000 : f32
      %50 = vector.broadcast %cst_19 : f32 to vector<8x3xf32>
      %c0_20 = arith.constant 0 : index
      %c0_21 = arith.constant 0 : index
      %51 = vector.load %arg4[%c0_20, %c0_21] : memref<8x3xf32, #tpu.memory_space<vmem>>, vector<8x3xf32>
      tpu.vector_store %arg4[%c0_20, %c0_21], %50 {strides = array<i32>} : memref<8x3xf32, #tpu.memory_space<vmem>>, vector<8x3xf32>,
    } else {
    }
    %c0 = arith.constant 0 : index
    %c0_1 = arith.constant 0 : index
    %3 = vector.load %arg2[%c0, %c0_1] : memref<8x256xf32, #tpu.memory_space<vmem>>, vector<8x256xf32>
    %4 = tpu.iota {dimensions = array<i32: 1>} : vector<8x256xi32>
    %cst = arith.constant dense<0xFF800000> : vector<8xf32>
    %5 = vector.multi_reduction <maximumf>, %3, %cst [1] : vector<8x256xf32> to vector<8xf32>
    %6 = vector.shape_cast %5 : vector<8xf32> to vector<8x1xf32>
    %7 = tpu.reduce_index %3 {axis = 1 : i32, kind = #tpu.reduction_kind<arg_max>} : vector<8x256xf32> -> vector<8xi32>
    %8 = vector.shape_cast %7 : vector<8xi32> to vector<8x1xi32>
    %9 = vector.broadcast %8 : vector<8x1xi32> to vector<8x256xi32>
    %10 = arith.cmpi eq, %4, %9 : vector<8x256xi32>
    %cst_2 = arith.constant 0xFF800000 : f32
    %11 = vector.broadcast %cst_2 : f32 to vector<8x256xf32>
    %12 = arith.select %10, %11, %3 : vector<8x256xi1>, vector<8x256xf32>
    %cst_3 = arith.constant dense<0xFF800000> : vector<8xf32>
    %13 = vector.multi_reduction <maximumf>, %12, %cst_3 [1] : vector<8x256xf32> to vector<8xf32>
    %14 = vector.shape_cast %13 : vector<8xf32> to vector<8x1xf32>
    %15 = tpu.reduce_index %12 {axis = 1 : i32, kind = #tpu.reduction_kind<arg_max>} : vector<8x256xf32> -> vector<8xi32>
    %16 = vector.shape_cast %15 : vector<8xi32> to vector<8x1xi32>
    %17 = vector.broadcast %16 : vector<8x1xi32> to vector<8x256xi32>
    %18 = arith.cmpi eq, %4, %17 : vector<8x256xi32>
    %cst_4 = arith.constant 0xFF800000 : f32
    %19 = vector.broadcast %cst_4 : f32 to vector<8x256xf32>
    %20 = arith.select %18, %19, %12 : vector<8x256xi1>, vector<8x256xf32>
    %cst_5 = arith.constant dense<0xFF800000> : vector<8xf32>
    %21 = vector.multi_reduction <maximumf>, %20, %cst_5 [1] : vector<8x256xf32> to vector<8xf32>
    %22 = vector.shape_cast %21 : vector<8xf32> to vector<8x1xf32>
    %c0_6 = arith.constant 0 : index
    %c0_7 = arith.constant 0 : index
    %23 = vector.load %arg4[%c0_6, %c0_7] : memref<8x3xf32, #tpu.memory_space<vmem>>, vector<8x3xf32>
    %24 = tpu.concatenate %23, %6, %14, %22 in 1 : vector<8x3xf32>, vector<8x1xf32>, vector<8x1xf32>, vector<8x1xf32> -> vector<8x6xf32>
    %25 = tpu.iota {dimensions = array<i32: 1>} : vector<8x6xi32>
    %cst_8 = arith.constant dense<0xFF800000> : vector<8xf32>
    %26 = vector.multi_reduction <maximumf>, %24, %cst_8 [1] : vector<8x6xf32> to vector<8xf32>
    %27 = vector.shape_cast %26 : vector<8xf32> to vector<8x1xf32>
    %c0_9 = arith.constant 0 : index
    %c0_10 = arith.constant 0 : index
    %28 = vector.load %arg4[%c0_9, %c0_10] : memref<8x3xf32, #tpu.memory_space<vmem>>, vector<8x1xf32>
    tpu.vector_store %arg4[%c0_9, %c0_10], %27 {strides = array<i32>} : memref<8x3xf32, #tpu.memory_space<vmem>>, vector<8x1xf32>,
    %29 = tpu.reduce_index %24 {axis = 1 : i32, kind = #tpu.reduction_kind<arg_max>} : vector<8x6xf32> -> vector<8xi32>
    %30 = vector.shape_cast %29 : vector<8xi32> to vector<8x1xi32>
    %31 = vector.broadcast %30 : vector<8x1xi32> to vector<8x6xi32>
    %32 = arith.cmpi eq, %25, %31 : vector<8x6xi32>
    %cst_11 = arith.constant 0xFF800000 : f32
    %33 = vector.broadcast %cst_11 : f32 to vector<8x6xf32>
    %34 = arith.select %32, %33, %24 : vector<8x6xi1>, vector<8x6xf32>
    %cst_12 = arith.constant dense<0xFF800000> : vector<8xf32>
    %35 = vector.multi_reduction <maximumf>, %34, %cst_12 [1] : vector<8x6xf32> to vector<8xf32>
    %36 = vector.shape_cast %35 : vector<8xf32> to vector<8x1xf32>
    %c0_13 = arith.constant 0 : index
    %c1 = arith.constant 1 : index
    %37 = vector.load %arg4[%c0_13, %c1] : memref<8x3xf32, #tpu.memory_space<vmem>>, vector<8x1xf32>
    tpu.vector_store %arg4[%c0_13, %c1], %36 {strides = array<i32>} : memref<8x3xf32, #tpu.memory_space<vmem>>, vector<8x1xf32>,
    %38 = tpu.reduce_index %34 {axis = 1 : i32, kind = #tpu.reduction_kind<arg_max>} : vector<8x6xf32> -> vector<8xi32>
    %39 = vector.shape_cast %38 : vector<8xi32> to vector<8x1xi32>
    %40 = vector.broadcast %39 : vector<8x1xi32> to vector<8x6xi32>
    %41 = arith.cmpi eq, %25, %40 : vector<8x6xi32>
    %cst_14 = arith.constant 0xFF800000 : f32
    %42 = vector.broadcast %cst_14 : f32 to vector<8x6xf32>
    %43 = arith.select %41, %42, %34 : vector<8x6xi1>, vector<8x6xf32>
    %cst_15 = arith.constant dense<0xFF800000> : vector<8xf32>
    %44 = vector.multi_reduction <maximumf>, %43, %cst_15 [1] : vector<8x6xf32> to vector<8xf32>
    %45 = vector.shape_cast %44 : vector<8xf32> to vector<8x1xf32>
    %c0_16 = arith.constant 0 : index
    %c2 = arith.constant 2 : index
    %46 = vector.load %arg4[%c0_16, %c2] : memref<8x3xf32, #tpu.memory_space<vmem>>, vector<8x1xf32>
    tpu.vector_store %arg4[%c0_16, %c2], %45 {strides = array<i32>} : memref<8x3xf32, #tpu.memory_space<vmem>>, vector<8x1xf32>,
    %c0_i32_17 = arith.constant 0 : i32
    %47 = arith.cmpi eq, %arg1, %c0_i32_17 : i32
    %48 = arith.extui %47 : i1 to i32
    %c0_i32_18 = arith.constant 0 : i32
    %49 = arith.cmpi ne, %48, %c0_i32_18 : i32
    scf.if %49 {
      %c0_19 = arith.constant 0 : index
      %c0_20 = arith.constant 0 : index
      %50 = vector.load %arg4[%c0_19, %c0_20] : memref<8x3xf32, #tpu.memory_space<vmem>>, vector<8x3xf32>
      %c0_21 = arith.constant 0 : index
      %c0_22 = arith.constant 0 : index
      %51 = vector.load %arg3[%c0_21, %c0_22] : memref<8x3xf32, #tpu.memory_space<vmem>>, vector<8x3xf32>
      tpu.vector_store %arg3[%c0_21, %c0_22], %50 {strides = array<i32>} : memref<8x3xf32, #tpu.memory_space<vmem>>, vector<8x3xf32>,
    } else {
    }
    return
  }
  func.func @transform_0(%arg0: i32, %arg1: i32) -> (i32, i32) {
    %c0_i32 = arith.constant 0 : i32
    return %arg0, %arg1 : i32, i32
  }
  func.func @transform_1(%arg0: i32, %arg1: i32) -> (i32, i32) {
    %c0_i32 = arith.constant 0 : i32
    %c0_i32_0 = arith.constant 0 : i32
    return %arg0, %c0_i32 : i32, i32
  }
}

</mosaic_0001>

<llo_original>
// kernel: tpu_custom_call.1
$region0: #{tpu_custom_call.1}
  #allocation0 [shape = 'u32[]', space=smem, size = 0x4, offset = 0x4, fixed_abs, tag = 'smem constant byte address 0x4 - core index']
  #allocation1 [shape = 'u32[144,128]{1,0:T(1,128)}', space=vmem, size = 0x12000, scoped, tag = 'internal scratch']
  #allocation2 [shape = 'f32[8,3]{1,0:T(8,128)}', space=vmem, size = 0x1000, scoped, tag = 'scratch operand']
  %s0 = inlined_call_operand.hbm [shape: f32[8,256], index: 0, kind: input, shape index: {}]
  %s1 = inlined_call_operand.vmem [shape: f32[8,3], index: 1, kind: output, shape index: {}]
  %s2 = sld [smem:[#allocation0]]
  $region26: #{tpu_custom_call.1} parent=0
    _
  %s4 = ssub.s32 1, %s2
  %s5 = scalar_select 0, %s4, %s2
  $region1: #{tpu_custom_call.1} parent=0
    #allocation3 [shape = 'u8[8192]{0}', space=vmem, size = 0x2000, scoped, tag = 'input window, operand 0, single buffered']
    #allocation4 [shape = 's32[1]{0}', space=sflag, size = 0x4, scoped, tag = 'scoped memory for tpu_custom_call.1']
    %6 = vsyncpa [#allocation4], 0
    // Predicated region
    $region2: #{tpu_custom_call.1} parent=1 // pred_check
      _
    $region3: #{tpu_custom_call.1} parent=1 // pred_check_branch
      %8 = sbr.rel (0) target = $region5
    $region4: #{tpu_custom_call.1} parent=1 // pred_region
      %s10 = ssub.s32 256, 256
      %11 = vsyncadd [#allocation4], %s10
      %s13 = sshll.u32 [#allocation3], 4
      %s14 = int_to_ptr.vmem [resolvable:$true] %s13
      %16 = dma.hbm_to_vmem [thread:$0]  %s0, 256, %s14, [#allocation4]
    $region5: #{tpu_custom_call.1} parent=1 // pred_fallthru
      _
    // Predicated region
    $region6: #{tpu_custom_call.1} parent=1 // pred_check
      _
    $region7: #{tpu_custom_call.1} parent=1 // pred_check_branch
      %18 = sbr.rel (0) target = $region9
    $region8: #{tpu_custom_call.1} parent=1 // pred_region
      %19 = dma.done [#allocation4], 256
    $region9: #{tpu_custom_call.1} parent=1 // pred_fallthru
      _
    %p20 = scmp.eq.s32.totalorder 0, 0
    // Predicated region
    $region10: #{tpu_custom_call.1} parent=1 // pred_check
      %p21 = pneg %p20
    $region11: #{tpu_custom_call.1} parent=1 // pred_check_branch
      %23 = sbr.rel (%p21) target = $region13
    $region12: #{tpu_custom_call.1} parent=1 // pred_region
      %vm24 = vcmask 23552
      %25 = vst.msk [vmem:[#allocation2] sm:$0xff] %vm24, -inf
    $region13: #{tpu_custom_call.1} parent=1 // pred_fallthru
      _
    %v26 = vld [vmem:[#allocation3] sm:$0xff]
    %v27 = vld [vmem:[#allocation3 + $0x8] sm:$0xff]
    %v28 = vlaneseq
    %v29 = vand.u32 %v28, 127
    %v30 = vadd.s32 %v29, 128
    %v31 = vmax.f32 %v26, %v27
    %32 = vmax.xlane.f32.xlu0 %v31
    %v33 = vpop.xlane.xlu0 %32
    %vm34 = vcmp.ge.f32.partialorder %v26, %v27
    %v35 = vsel %vm34, %v26, %v27
    %v36 = vsel %vm34, %v29, %v30
    %37 = vmax.index.xlane.f32.xlu0 %v35
    %v38 = vpop.xlane.xlu0 %37
    %39 = vset.pattern.permute.xlu0 %v38
    %40 = vperm.xlu0 %39, %v36
    %v41 = vpop.permute.xlu0 %40
    %vm42 = vcmp.eq.s32.totalorder %v29, %v41
    %vm43 = vcmp.eq.s32.totalorder %v30, %v41
    %v44 = vsel %vm42, -inf, %v26
    %v45 = vsel %vm43, -inf, %v27
    %v46 = vmax.f32 %v44, %v45
    %47 = vmax.xlane.f32.xlu0 %v46
    %v48 = vpop.xlane.xlu0 %47
    %vm49 = vcmp.ge.f32.partialorder %v44, %v45
    %v50 = vsel %vm49, %v44, %v45
    %v51 = vsel %vm49, %v29, %v30
    %52 = vmax.index.xlane.f32.xlu0 %v50
    %v53 = vpop.xlane.xlu0 %52
    %54 = vset.pattern.permute.xlu0 %v53
    %55 = vperm.xlu0 %54, %v51
    %v56 = vpop.permute.xlu0 %55
    %vm57 = vcmp.eq.s32.totalorder %v29, %v56
    %vm58 = vcmp.eq.s32.totalorder %v30, %v56
    %v59 = vsel %vm57, -inf, %v44
    %v60 = vsel %vm58, -inf, %v45
    %v61 = vmax.f32 %v59, %v60
    %62 = vmax.xlane.f32.xlu0 %v61
    %v63 = vpop.xlane.xlu0 %62
    %v64 = vld [vmem:[#allocation2] sm:$0xff]
    %vm65 = vcmask 23552
    %v66 = vsel %vm65, %v64, %v33
    %vm67 = vcmask 31744
    %v68 = vsel %vm67, %v66, %v48
    %vm69 = vcmask 39936
    %v70 = vsel %vm69, %v68, %v63
    %vm71 = vcmask 48128
    %v72 = vsel %vm71, %v70, -inf
    %73 = vmax.xlane.f32.xlu0 %v72
    %v74 = vpop.xlane.xlu0 %73
    %vm75 = vcmask 7168
    %76 = vst.msk [vmem:[#allocation2] sm:$0xff] %vm75, %v74
    %77 = vmax.index.xlane.f32.xlu0 %v72
    %v78 = vpop.xlane.xlu0 %77
    %vm79 = vcmp.eq.s32.totalorder %v29, %v78
    %v80 = vsel %vm79, -inf, %v70
    %v81 = vsel %vm71, %v80, -inf
    %82 = vmax.xlane.f32.xlu0 %v81
    %v83 = vpop.xlane.xlu0 %82
    %vm84 = vcmask 15368
    %85 = vst.msk [vmem:[#allocation2] sm:$0xff] %vm84, %v83
    %86 = vmax.index.xlane.f32.xlu0 %v81
    %v87 = vpop.xlane.xlu0 %86
    %vm88 = vcmp.eq.s32.totalorder %v29, %v87
    %v89 = vsel %vm88, -inf, %v80
    %v90 = vsel %vm71, %v89, -inf
    %91 = vmax.xlane.f32.xlu0 %v90
    %v92 = vpop.xlane.xlu0 %91
    %vm93 = vcmask 23568
    %94 = vst.msk [vmem:[#allocation2] sm:$0xff] %vm93, %v92
    // Predicated region
    $region14: #{tpu_custom_call.1} parent=1 // pred_check
      %p95 = pneg %p20
    $region15: #{tpu_custom_call.1} parent=1 // pred_check_branch
      %97 = sbr.rel (%p95) target = $region17
    $region16: #{tpu_custom_call.1} parent=1 // pred_region
      %v98 = vld [vmem:[#allocation2] sm:$0xff]
      %99 = vst.msk [vmem:[%s1] sm:$0xff] %vm65, %v98
    $region17: #{tpu_custom_call.1} parent=1 // pred_fallthru
      _
    // Predicated region
    $region18: #{tpu_custom_call.1} parent=1 // pred_check
      _
    $region19: #{tpu_custom_call.1} parent=1 // pred_check_branch
      %101 = sbr.rel (0) target = $region21
    $region20: #{tpu_custom_call.1} parent=1 // pred_region
      _
    $region21: #{tpu_custom_call.1} parent=1 // pred_fallthru
      _
    // Predicated region
    $region22: #{tpu_custom_call.1} parent=1 // pred_check
      _
    $region23: #{tpu_custom_call.1} parent=1 // pred_check_branch
      %103 = sbr.rel (0) target = $region25
    $region24: #{tpu_custom_call.1} parent=1 // pred_region
      _
    $region25: #{tpu_custom_call.1} parent=1 // pred_fallthru
      _
    %104 = vsyncpa [#allocation4], 1

</llo_original>
